<compile_context>
chip_gen: v7x
topology: tpu7x:2x2x1
jax: 0.10.0
libtpu: 0.0.40
codegen_flags: <defaults>
</compile_context>

<pallas_src>
import jax
import jax.numpy as jnp
from jax.experimental import pallas as pl
from jax.experimental.pallas import tpu as pltpu


def _attention_kernel(w_ref, hs_ref, ctx_ref, attw_ref):
    # w_ref:    (1, H)      weight vector (same block for every grid step)
    # hs_ref:   (TB, S, H)  hidden states for the current batch block
    # ctx_ref:  (TB, H)     context vectors
    # attw_ref: (TB, S)     attention weights (lane-dense; unsqueezed in wrapper)
    hs = hs_ref[...]                                   # (TB, S, H)
    tb = hs_ref.shape[0]
    h = w_ref.shape[1]

    # scores[b, 0, s] = <hs[b, s, :], w>  with f32 accumulation on the MXU.
    w_b = jnp.broadcast_to(w_ref[...][None, :, :], (tb, 1, h))     # tiny
    scores = jnp.einsum("bqh,bsh->bqs", w_b.astype(hs.dtype), hs,
                        preferred_element_type=jnp.float32)        # (TB, 1, S)

    # Numerically-stable softmax over the sequence axis; EXACT normalization
    # (one divide per row, fully hidden under the streaming DMA).
    m = jnp.max(scores, axis=-1, keepdims=True)
    e = jnp.exp(scores - m)
    denom = jnp.sum(e, axis=-1, keepdims=True)
    attw = e / denom                                               # (TB, 1, S) f32

    # context via the MXU: (TB,1,S) x (TB,S,H) -> (TB,1,H), f32 accumulation.
    # TODO(synk): on v5e, verify via a bundle dump that these M=1 matmuls stay
    # hidden under the HBM DMA; if the MXU/MRF pop path binds, switch the
    # context to a VPU multiply + sublane-S reduce instead.
    ctx = jnp.einsum("bqs,bsh->bqh", attw.astype(hs.dtype), hs,
                     preferred_element_type=jnp.float32)           # (TB, 1, H)

    ctx_ref[...] = ctx[:, 0, :].astype(ctx_ref.dtype)
    attw_ref[...] = attw[:, 0, :].astype(attw_ref.dtype)


def _round_up(x, m):
    return -(-x // m) * m


def _default_vmem_limit_bytes():
    """Scoped-VMEM limit derived from the chip (64 MiB/TC on v7x, 128 MiB else)."""
    try:
        cap = int(pltpu.get_tpu_info().vmem_capacity_bytes)
    except Exception:
        cap = 64 << 20          # conservative: assume the smallest (v7x per-TC)
    return min(int(cap * 0.6), 64 << 20)


def _choose_block_b(B, S, H, dtype, vmem_limit_bytes):
    """Largest batch-block TB that is a multiple of the sublane tile (or == B),
    divides B, fits the VMEM budget (double-buffered + temporaries), and keeps
    >=2 grid steps for pipelining once the input is more than a few MiB."""
    itemsize = jnp.dtype(dtype).itemsize
    sub = max(8, 32 // itemsize)                      # 8 f32 / 16 bf16 / 32 int8
    # Real (padded) VMEM footprint of one (1, S, H) input row.
    padded_row = _round_up(max(H, 1), 128) * _round_up(max(S, 1), sub) * itemsize
    # Budget against 2x tile (double-buffered input) + ~1x tile of in-kernel
    # temporaries + output blocks, with headroom under the scoped limit.
    budget = int(vmem_limit_bytes * 0.9)
    max_tb = max(1, budget // (4 * padded_row))
    # >=2 grid steps once the input is big enough to benefit from DMA/compute
    # overlap (and so both v7x TensorCores get work on the 'parallel' axis).
    total_bytes = B * padded_row
    min_steps = 2 if (total_bytes > (4 << 20) and B > 1) else 1

    def _best(cands):
        best = None
        for d in cands:
            if B % d == 0 and d <= max_tb and (B // d) >= min_steps:
                best = d if best is None else max(best, d)
        return best

    tb = _best(range(sub, B + 1, sub))        # sublane-aligned -> unmasked stores
    if tb is None and B <= max_tb:
        tb = B                                # block == full dim: (8,128) rule OK
    if tb is None:
        tb = _best(range(1, B + 1))           # last resort (masked stores)
    if tb is None:
        tb = B
    return tb


def attention_layer(hidden_states, weight_vector, *, block_b=None,
                    vmem_limit_bytes=None):
    """hidden_states: (B, S, H); weight_vector: (H,).
    Returns (context_vector (B, H), attention_weights (B, S, 1))."""
    B, S, H = hidden_states.shape
    if vmem_limit_bytes is None:
        vmem_limit_bytes = _default_vmem_limit_bytes()
    TB = (block_b if block_b is not None
          else _choose_block_b(B, S, H, hidden_states.dtype, vmem_limit_bytes))
    assert B % TB == 0

    w2d = weight_vector.astype(hidden_states.dtype).reshape(1, H)

    grid_spec = pltpu.PrefetchScalarGridSpec(
        num_scalar_prefetch=0,
        grid=(B // TB,),
        in_specs=[
            pl.BlockSpec((1, H), lambda b: (0, 0)),          # weight (shared)
            pl.BlockSpec((TB, S, H), lambda b: (b, 0, 0)),   # hidden-state block
        ],
        out_specs=[
            pl.BlockSpec((TB, H), lambda b: (b, 0)),         # context vectors
            pl.BlockSpec((TB, S), lambda b: (b, 0)),         # attn weights (lane-dense)
        ],
    )

    ctx, attw = pl.pallas_call(
        _attention_kernel,
        out_shape=(
            jax.ShapeDtypeStruct((B, H), hidden_states.dtype),
            jax.ShapeDtypeStruct((B, S), hidden_states.dtype),
        ),
        grid_spec=grid_spec,
        compiler_params=pltpu.CompilerParams(
            dimension_semantics=("parallel",),
            vmem_limit_bytes=int(vmem_limit_bytes),
        ),
    )(w2d, hidden_states)

    # Match the PyTorch module's (B, S, 1) attention-weights shape in the wrapper.
    return ctx, attw[..., None]


def _reference(hidden_states, weight_vector):
    scores = jnp.einsum("bsh,h->bs", hidden_states, weight_vector)
    attw = jax.nn.softmax(scores, axis=1)[..., None]
    ctx = jnp.sum(attw * hidden_states, axis=1)
    return ctx, attw


if __name__ == "__main__":
    B, S, H = 2, 8, 32
    key = jax.random.PRNGKey(0)
    k1, k2 = jax.random.split(key)
    hidden_states = jax.random.normal(k1, (B, S, H), dtype=jnp.float32)
    # deterministic stand-in for the module's nn.Parameter(torch.randn(hidden_size))
    weight_vector = jax.random.normal(k2, (H,), dtype=jnp.float32)

    ctx, attw = attention_layer(hidden_states, weight_vector)
    jax.block_until_ready((ctx, attw))

    ctx_ref, attw_ref = _reference(hidden_states, weight_vector)
    assert ctx.shape == (B, H) and attw.shape == (B, S, 1)
    # f32 tolerance with room for MXU accumulation-order differences.
    assert jnp.allclose(ctx, ctx_ref, atol=1e-4, rtol=1e-4)
    assert jnp.allclose(attw, attw_ref, atol=1e-4, rtol=1e-4)

    print("KERNEL_OK")
</pallas_src>

<mosaic_0001>
module attributes {stable_mosaic.version = 11 : i64} {
  func.func @_attention_kernel(%arg0: i32, %arg1: memref<1x32xf32, #tpu.memory_space<vmem>>, %arg2: memref<2x8x32xf32, #tpu.memory_space<vmem>>, %arg3: memref<2x32xf32, #tpu.memory_space<vmem>>, %arg4: memref<2x8xf32, #tpu.memory_space<vmem>>) attributes {dimension_semantics = [#tpu.dimension_semantics<parallel>], iteration_bounds = array<i64: 1>, scalar_prefetch = 0 : i64, scratch_operands = 0 : i64, tpu.core_type = #tpu.core_type<tc>, window_params = [{pipeline_mode = #tpu.pipeline_mode<synchronous>, transform_indices = @transform_0, window_bounds = array<i64: 1, 32>}, {transform_indices = @transform_1, window_bounds = array<i64: 2, 8, 32>}, {transform_indices = @transform_2, window_bounds = array<i64: 2, 32>}, {transform_indices = @transform_3, window_bounds = array<i64: 2, 8>}]} {
    %c0 = arith.constant 0 : index
    %c0_0 = arith.constant 0 : index
    %c0_1 = arith.constant 0 : index
    %0 = vector.load %arg2[%c0, %c0_0, %c0_1] : memref<2x8x32xf32, #tpu.memory_space<vmem>>, vector<2x8x32xf32>
    %c0_2 = arith.constant 0 : index
    %c0_3 = arith.constant 0 : index
    %1 = vector.load %arg1[%c0_2, %c0_3] : memref<1x32xf32, #tpu.memory_space<vmem>>, vector<1x32xf32>
    %2 = vector.shape_cast %1 : vector<1x32xf32> to vector<1x1x32xf32>
    %3 = vector.shape_cast %2 : vector<1x1x32xf32> to vector<1x1x32xf32>
    %4 = vector.broadcast %3 : vector<1x1x32xf32> to vector<2x1x32xf32>
    "tpu.trace_start"() <{level = 10 : i32, message = "bqh,bsh->bqs"}> : () -> ()
    %cst = arith.constant dense<0.000000e+00> : vector<2x1x8xf32>
    %5 = tpu.matmul %4, %0, %cst {dimension_numbers = #tpu.dot_dimension_numbers<[2], [2], [1], [1], [0, 0, 0, 1, 1, 1], [0], [0]>} : vector<2x1x32xf32>, vector<2x8x32xf32>, vector<2x1x8xf32> -> vector<2x1x8xf32>
    "tpu.trace_stop"() : () -> ()
    %cst_4 = arith.constant dense<0xFF800000> : vector<2x1xf32>
    %6 = vector.multi_reduction <maximumf>, %5, %cst_4 [2] : vector<2x1x8xf32> to vector<2x1xf32>
    %7 = vector.shape_cast %6 : vector<2x1xf32> to vector<2x1x1xf32>
    %8 = vector.broadcast %7 : vector<2x1x1xf32> to vector<2x1x8xf32>
    %9 = arith.subf %5, %8 : vector<2x1x8xf32>
    %10 = math.exp %9 : vector<2x1x8xf32>
    %cst_5 = arith.constant dense<0.000000e+00> : vector<2x1xf32>
    %11 = vector.multi_reduction <add>, %10, %cst_5 [2] : vector<2x1x8xf32> to vector<2x1xf32>
    %12 = vector.shape_cast %11 : vector<2x1xf32> to vector<2x1x1xf32>
    %13 = vector.broadcast %12 : vector<2x1x1xf32> to vector<2x1x8xf32>
    %14 = arith.divf %10, %13 : vector<2x1x8xf32>
    "tpu.trace_start"() <{level = 10 : i32, message = "bqs,bsh->bqh"}> : () -> ()
    %cst_6 = arith.constant dense<0.000000e+00> : vector<2x1x32xf32>
    %15 = tpu.matmul %14, %0, %cst_6 {dimension_numbers = #tpu.dot_dimension_numbers<[2], [1], [1], [2], [0, 0, 0, 1, 1, 2], [0], [0]>} : vector<2x1x8xf32>, vector<2x8x32xf32>, vector<2x1x32xf32> -> vector<2x1x32xf32>
    "tpu.trace_stop"() : () -> ()
    %16 = vector.shape_cast %15 : vector<2x1x32xf32> to vector<2x32xf32>
    %c0_7 = arith.constant 0 : index
    %c0_8 = arith.constant 0 : index
    %17 = vector.load %arg3[%c0_7, %c0_8] : memref<2x32xf32, #tpu.memory_space<vmem>>, vector<2x32xf32>
    tpu.vector_store %arg3[%c0_7, %c0_8], %16 {strides = array<i32>} : memref<2x32xf32, #tpu.memory_space<vmem>>, vector<2x32xf32>,
    %18 = vector.shape_cast %14 : vector<2x1x8xf32> to vector<2x8xf32>
    %c0_9 = arith.constant 0 : index
    %c0_10 = arith.constant 0 : index
    %19 = vector.load %arg4[%c0_9, %c0_10] : memref<2x8xf32, #tpu.memory_space<vmem>>, vector<2x8xf32>
    tpu.vector_store %arg4[%c0_9, %c0_10], %18 {strides = array<i32>} : memref<2x8xf32, #tpu.memory_space<vmem>>, vector<2x8xf32>,
    return
  }
  func.func @transform_0(%arg0: i32) -> (i32, i32) {
    %c0_i32 = arith.constant 0 : i32
    %c0_i32_0 = arith.constant 0 : i32
    %c0_i32_1 = arith.constant 0 : i32
    return %c0_i32, %c0_i32_0 : i32, i32
  }
  func.func @transform_1(%arg0: i32) -> (i32, i32, i32) {
    %c0_i32 = arith.constant 0 : i32
    %c0_i32_0 = arith.constant 0 : i32
    %c0_i32_1 = arith.constant 0 : i32
    return %arg0, %c0_i32, %c0_i32_0 : i32, i32, i32
  }
  func.func @transform_2(%arg0: i32) -> (i32, i32) {
    %c0_i32 = arith.constant 0 : i32
    %c0_i32_0 = arith.constant 0 : i32
    return %arg0, %c0_i32 : i32, i32
  }
  func.func @transform_3(%arg0: i32) -> (i32, i32) {
    %c0_i32 = arith.constant 0 : i32
    %c0_i32_0 = arith.constant 0 : i32
    return %arg0, %c0_i32 : i32, i32
  }
}

</mosaic_0001>

<llo_original>
// kernel: tpu_custom_call.1
$region0: #{tpu_custom_call.1}
  #allocation0 [shape = 'u32[]', space=smem, size = 0x4, offset = 0x4, fixed_abs, tag = 'smem constant byte address 0x4 - core index']
  #allocation1 [shape = 'u32[144,128]{1,0:T(1,128)}', space=vmem, size = 0x12000, scoped, tag = 'internal scratch']
  %s0 = inlined_call_operand.hbm [shape: f32[1,32], index: 0, kind: input, shape index: {}]
  %s1 = inlined_call_operand.hbm [shape: f32[2,8,32], index: 1, kind: input, shape index: {}]
  %s2 = inlined_call_operand.hbm [shape: f32[2,32], index: 2, kind: output, shape index: {0}]
  %s3 = inlined_call_operand.hbm [shape: f32[2,8], index: 3, kind: output, shape index: {1}]
  %4 = xla_tuple %s2, %s3
  %s5 = sld [smem:[#allocation0]]
  $region34: #{tpu_custom_call.1} parent=0
    _
  %s7 = ssub.s32 1, %s5
  %s8 = scalar_select 0, %s7, %s5
  $region1: #{tpu_custom_call.1} parent=0
    #allocation2 [shape = 'u8[512]{0}', space=vmem, size = 0x400, scoped, tag = 'input window, operand 0, single buffered']
    #allocation3 [shape = 's32[1]{0}', space=sflag, size = 0x4, scoped, tag = 'scoped memory for tpu_custom_call.1']
    #allocation4 [shape = 's32[1]{0}', space=sflag, size = 0x4, scoped, tag = 'scoped memory for tpu_custom_call.1']
    #allocation5 [shape = 'u8[8192]{0}', space=vmem, size = 0x2000, scoped, tag = 'input window, operand 1, single buffered']
    #allocation6 [shape = 's32[1]{0}', space=sflag, size = 0x4, scoped, tag = 'scoped memory for tpu_custom_call.1']
    #allocation7 [shape = 'u8[1024]{0}', space=vmem, size = 0x400, scoped, tag = 'output window, operand 0, single buffered']
    #allocation8 [shape = 'u8[1024]{0}', space=vmem, size = 0x400, scoped, tag = 'output window, operand 1, single buffered']
    #allocation9 [shape = 's32[1]{0}', space=sflag, size = 0x4, scoped, tag = 'scoped memory for tpu_custom_call.1']
    %9 = vsyncpa [#allocation3], 0
    %10 = vsyncpa [#allocation6], 0
    %11 = vsyncpa [#allocation4], 0
    %12 = vsyncpa [#allocation9], 0
    // Predicated region
    $region2: #{tpu_custom_call.1} parent=1 // pred_check
      _
    $region3: #{tpu_custom_call.1} parent=1 // pred_check_branch
      %14 = sbr.rel (0) target = $region5
    $region4: #{tpu_custom_call.1} parent=1 // pred_region
      %s16 = ssub.s32 16, 16
      %17 = vsyncadd [#allocation3], %s16
      %s19 = sshll.u32 [#allocation2], 4
      %s20 = int_to_ptr.vmem [resolvable:$true] %s19
      %22 = dma.hbm_to_vmem [thread:$0]  %s0, 16, %s20, [#allocation3]
    $region5: #{tpu_custom_call.1} parent=1 // pred_fallthru
      _
    // Predicated region
    $region6: #{tpu_custom_call.1} parent=1 // pred_check
      _
    $region7: #{tpu_custom_call.1} parent=1 // pred_check_branch
      %24 = sbr.rel (0) target = $region9
    $region8: #{tpu_custom_call.1} parent=1 // pred_region
      %s26 = ssub.s32 256, 256
      %27 = vsyncadd [#allocation6], %s26
      %s28 = sshll.u32 [#allocation5], 4
      %s29 = int_to_ptr.vmem [resolvable:$true] %s28
      %34 = dma.hbm_to_vmem [thread:$0]  %s1, 256, %s29, [#allocation6], 128, 128, 8
    $region9: #{tpu_custom_call.1} parent=1 // pred_fallthru
      _
    // Predicated region
    $region10: #{tpu_custom_call.1} parent=1 // pred_check
      _
    $region11: #{tpu_custom_call.1} parent=1 // pred_check_branch
      %36 = sbr.rel (0) target = $region13
    $region12: #{tpu_custom_call.1} parent=1 // pred_region
      %37 = dma.done [#allocation3], 16
    $region13: #{tpu_custom_call.1} parent=1 // pred_fallthru
      _
    // Predicated region
    $region14: #{tpu_custom_call.1} parent=1 // pred_check
      _
    $region15: #{tpu_custom_call.1} parent=1 // pred_check_branch
      %39 = sbr.rel (0) target = $region17
    $region16: #{tpu_custom_call.1} parent=1 // pred_region
      %40 = dma.done [#allocation6], 256
    $region17: #{tpu_custom_call.1} parent=1 // pred_fallthru
      _
    %v41 = vld [vmem:[#allocation5] sm:$0xff]
    %v42 = vld [vmem:[#allocation5 + $0x8] sm:$0xff]
    %v43 = vld [vmem:[#allocation2] sm:$0x1]
    %vm44 = vcmask 261120
    %v46 = vsel %vm44, %v43, 0
    %v49 = vsel %vm44, %v41, 0
    %51 = vmatprep.subr.mxu0 0.0
    %52 = vmatpush1.xpose.msra.mxu0 %v49
    %53 = vmatprep.subr.mxu0 0.0
    %54 = vmatpush1.xpose.msra.mxu0 0.0
    %55 = vmatprep.subr.mxu0 0.0
    %56 = vmatpush1.xpose.msra.mxu0 0.0
    %57 = vmatprep.subr.mxu0 0.0
    %58 = vmatpush1.xpose.msra.mxu0 0.0
    %59 = vmatprep.subr.mxu0 0.0
    %60 = vmatpush1.xpose.msra.mxu0 0.0
    %61 = vmatprep.subr.mxu0 0.0
    %62 = vmatpush1.xpose.msra.mxu0 0.0
    %63 = vmatprep.subr.mxu0 0.0
    %64 = vmatpush1.xpose.msra.mxu0 0.0
    %65 = vmatprep.subr.mxu0 0.0
    %66 = vmatpush1.xpose.msra.mxu0 0.0
    %67 = vmatprep.subr.mxu0 0.0
    %68 = vmatpush1.xpose.msra.mxu0 0.0
    %69 = vmatprep.subr.mxu0 0.0
    %70 = vmatpush1.xpose.msra.mxu0 0.0
    %71 = vmatprep.subr.mxu0 0.0
    %72 = vmatpush1.xpose.msra.mxu0 0.0
    %73 = vmatprep.subr.mxu0 0.0
    %74 = vmatpush1.xpose.msra.mxu0 0.0
    %75 = vmatprep.subr.mxu0 0.0
    %76 = vmatpush1.xpose.msra.mxu0 0.0
    %77 = vmatprep.subr.mxu0 0.0
    %78 = vmatpush1.xpose.msra.mxu0 0.0
    %79 = vmatprep.subr.mxu0 0.0
    %80 = vmatpush1.xpose.msra.mxu0 0.0
    %81 = vmatprep.subr.mxu0 0.0
    %82 = vmatpush1.xpose.msra.mxu0 0.0
    %83 = vmatprep.subr.mxu0 0.0
    %84 = vmatpush1.xpose.msra.mxu0 0.0
    %85 = vmatprep.subr.mxu0 0.0
    %86 = vmatpush1.xpose.msra.mxu0 0.0
    %87 = vmatprep.subr.mxu0 0.0
    %88 = vmatpush1.xpose.msra.mxu0 0.0
    %89 = vmatprep.subr.mxu0 0.0
    %90 = vmatpush1.xpose.msra.mxu0 0.0
    %91 = vmatprep.subr.mxu0 0.0
    %92 = vmatpush1.xpose.msra.mxu0 0.0
    %93 = vmatprep.subr.mxu0 0.0
    %94 = vmatpush1.xpose.msra.mxu0 0.0
    %95 = vmatprep.subr.mxu0 0.0
    %96 = vmatpush1.xpose.msra.mxu0 0.0
    %97 = vmatprep.subr.mxu0 0.0
    %98 = vmatpush1.xpose.msra.mxu0 0.0
    %99 = vmatprep.subr.mxu0 0.0
    %100 = vmatpush1.xpose.msra.mxu0 0.0
    %101 = vmatprep.subr.mxu0 0.0
    %102 = vmatpush1.xpose.msra.mxu0 0.0
    %103 = vmatprep.subr.mxu0 0.0
    %104 = vmatpush1.xpose.msra.mxu0 0.0
    %105 = vmatprep.subr.mxu0 0.0
    %106 = vmatpush1.xpose.msra.mxu0 0.0
    %107 = vmatprep.subr.mxu0 0.0
    %108 = vmatpush1.xpose.msra.mxu0 0.0
    %109 = vmatprep.subr.mxu0 0.0
    %110 = vmatpush1.xpose.msra.mxu0 0.0
    %111 = vmatprep.subr.mxu0 0.0
    %112 = vmatpush1.xpose.msra.mxu0 0.0
    %113 = vmatprep.subr.mxu0 0.0
    %114 = vmatpush1.xpose.msra.mxu0 0.0
    %115 = vmatprep.mubr.f32.mxu0 0.0
    %116 = vmatmul.mubr.f32.gmra.mrb[0].mxu0 %v46
    %v117 = vpop.f32.mrb[0].mxu0
    %v118 = vadd.f32 0.0, %v117
    %v119 = vpop.f32.mrb[0].mxu0
    %120 = vdwg.mxu0
    %v122 = vsel %vm44, %v42, 0
    %124 = vmatprep.subr.mxu0 0.0
    %125 = vmatpush1.xpose.msra.mxu0 %v122
    %126 = vmatprep.subr.mxu0 0.0
    %127 = vmatpush1.xpose.msra.mxu0 0.0
    %128 = vmatprep.subr.mxu0 0.0
    %129 = vmatpush1.xpose.msra.mxu0 0.0
    %130 = vmatprep.subr.mxu0 0.0
    %131 = vmatpush1.xpose.msra.mxu0 0.0
    %132 = vmatprep.subr.mxu0 0.0
    %133 = vmatpush1.xpose.msra.mxu0 0.0
    %134 = vmatprep.subr.mxu0 0.0
    %135 = vmatpush1.xpose.msra.mxu0 0.0
    %136 = vmatprep.subr.mxu0 0.0
    %137 = vmatpush1.xpose.msra.mxu0 0.0
    %138 = vmatprep.subr.mxu0 0.0
    %139 = vmatpush1.xpose.msra.mxu0 0.0
    %140 = vmatprep.subr.mxu0 0.0
    %141 = vmatpush1.xpose.msra.mxu0 0.0
    %142 = vmatprep.subr.mxu0 0.0
    %143 = vmatpush1.xpose.msra.mxu0 0.0
    %144 = vmatprep.subr.mxu0 0.0
    %145 = vmatpush1.xpose.msra.mxu0 0.0
    %146 = vmatprep.subr.mxu0 0.0
    %147 = vmatpush1.xpose.msra.mxu0 0.0
    %148 = vmatprep.subr.mxu0 0.0
    %149 = vmatpush1.xpose.msra.mxu0 0.0
    %150 = vmatprep.subr.mxu0 0.0
    %151 = vmatpush1.xpose.msra.mxu0 0.0
    %152 = vmatprep.subr.mxu0 0.0
    %153 = vmatpush1.xpose.msra.mxu0 0.0
    %154 = vmatprep.subr.mxu0 0.0
    %155 = vmatpush1.xpose.msra.mxu0 0.0
    %156 = vmatprep.subr.mxu0 0.0
    %157 = vmatpush1.xpose.msra.mxu0 0.0
    %158 = vmatprep.subr.mxu0 0.0
    %159 = vmatpush1.xpose.msra.mxu0 0.0
    %160 = vmatprep.subr.mxu0 0.0
    %161 = vmatpush1.xpose.msra.mxu0 0.0
    %162 = vmatprep.subr.mxu0 0.0
    %163 = vmatpush1.xpose.msra.mxu0 0.0
    %164 = vmatprep.subr.mxu0 0.0
    %165 = vmatpush1.xpose.msra.mxu0 0.0
    %166 = vmatprep.subr.mxu0 0.0
    %167 = vmatpush1.xpose.msra.mxu0 0.0
    %168 = vmatprep.subr.mxu0 0.0
    %169 = vmatpush1.xpose.msra.mxu0 0.0
    %170 = vmatprep.subr.mxu0 0.0
    %171 = vmatpush1.xpose.msra.mxu0 0.0
    %172 = vmatprep.subr.mxu0 0.0
    %173 = vmatpush1.xpose.msra.mxu0 0.0
    %174 = vmatprep.subr.mxu0 0.0
    %175 = vmatpush1.xpose.msra.mxu0 0.0
    %176 = vmatprep.subr.mxu0 0.0
    %177 = vmatpush1.xpose.msra.mxu0 0.0
    %178 = vmatprep.subr.mxu0 0.0
    %179 = vmatpush1.xpose.msra.mxu0 0.0
    %180 = vmatprep.subr.mxu0 0.0
    %181 = vmatpush1.xpose.msra.mxu0 0.0
    %182 = vmatprep.subr.mxu0 0.0
    %183 = vmatpush1.xpose.msra.mxu0 0.0
    %184 = vmatprep.subr.mxu0 0.0
    %185 = vmatpush1.xpose.msra.mxu0 0.0
    %186 = vmatprep.subr.mxu0 0.0
    %187 = vmatpush1.xpose.msra.mxu0 0.0
    %188 = vmatprep.mubr.f32.mxu0 0.0
    %189 = vmatmul.mubr.f32.gmra.mrb[0].mxu0 %v46
    %v190 = vpop.f32.mrb[0].mxu0
    %v191 = vadd.f32 0.0, %v190
    %v192 = vpop.f32.mrb[0].mxu0
    %193 = vdwg.mxu0
    %vm194 = vcmask 57344
    %v195 = vsel %vm194, %v118, -inf
    %196 = vmax.xlane.f32.xlu0 %v195
    %v197 = vpop.xlane.xlu0 %196
    %v198 = vsel %vm194, %v191, -inf
    %199 = vmax.xlane.f32.xlu0 %v198
    %v200 = vpop.xlane.xlu0 %199
    %v201 = vsub.f32 %v118, %v197
    %v202 = vsub.f32 %v191, %v200
    %v203 = vmul.f32 %v201, 1.442695
    %v204 = vpow.pop %v203
    %v205 = vmul.f32 %v202, 1.442695
    %v206 = vpow.pop %v205
    %v207 = vsel %vm194, %v204, 0.0
    %208 = vadd.xlane.f32.xlu0 %v207
    %v209 = vpop.xlane.xlu0 %208
    %v210 = vsel %vm194, %v206, 0.0
    %211 = vadd.xlane.f32.xlu0 %v210
    %v212 = vpop.xlane.xlu0 %211
    %v213 = vrcp.pop %v209
    %v214 = vmul.f32 %v204, %v213
    %v215 = vrcp.pop %v212
    %v216 = vmul.f32 %v206, %v215
    %vm217 = vcmask 64512
    %v219 = vsel %vm217, %v214, 0
    %221 = vmatprep.subr.mxu0 0.0
    %222 = vmatpush1.msra.mxu0 %v41
    %223 = vmatprep.subr.mxu0 0.0
    %224 = vmatpush1.msra.mxu0 0.0
    %225 = vmatprep.subr.mxu0 0.0
    %226 = vmatpush1.msra.mxu0 0.0
    %227 = vmatprep.subr.mxu0 0.0
    %228 = vmatpush1.msra.mxu0 0.0
    %229 = vmatprep.subr.mxu0 0.0
    %230 = vmatpush1.msra.mxu0 0.0
    %231 = vmatprep.subr.mxu0 0.0
    %232 = vmatpush1.msra.mxu0 0.0
    %233 = vmatprep.subr.mxu0 0.0
    %234 = vmatpush1.msra.mxu0 0.0
    %235 = vmatprep.subr.mxu0 0.0
    %236 = vmatpush1.msra.mxu0 0.0
    %237 = vmatprep.subr.mxu0 0.0
    %238 = vmatpush1.msra.mxu0 0.0
    %239 = vmatprep.subr.mxu0 0.0
    %240 = vmatpush1.msra.mxu0 0.0
    %241 = vmatprep.subr.mxu0 0.0
    %242 = vmatpush1.msra.mxu0 0.0
    %243 = vmatprep.subr.mxu0 0.0
    %244 = vmatpush1.msra.mxu0 0.0
    %245 = vmatprep.subr.mxu0 0.0
    %246 = vmatpush1.msra.mxu0 0.0
    %247 = vmatprep.subr.mxu0 0.0
    %248 = vmatpush1.msra.mxu0 0.0
    %249 = vmatprep.subr.mxu0 0.0
    %250 = vmatpush1.msra.mxu0 0.0
    %251 = vmatprep.subr.mxu0 0.0
    %252 = vmatpush1.msra.mxu0 0.0
    %253 = vmatprep.subr.mxu0 0.0
    %254 = vmatpush1.msra.mxu0 0.0
    %255 = vmatprep.subr.mxu0 0.0
    %256 = vmatpush1.msra.mxu0 0.0
    %257 = vmatprep.subr.mxu0 0.0
    %258 = vmatpush1.msra.mxu0 0.0
    %259 = vmatprep.subr.mxu0 0.0
    %260 = vmatpush1.msra.mxu0 0.0
    %261 = vmatprep.subr.mxu0 0.0
    %262 = vmatpush1.msra.mxu0 0.0
    %263 = vmatprep.subr.mxu0 0.0
    %264 = vmatpush1.msra.mxu0 0.0
    %265 = vmatprep.subr.mxu0 0.0
    %266 = vmatpush1.msra.mxu0 0.0
    %267 = vmatprep.subr.mxu0 0.0
    %268 = vmatpush1.msra.mxu0 0.0
    %269 = vmatprep.subr.mxu0 0.0
    %270 = vmatpush1.msra.mxu0 0.0
    %271 = vmatprep.subr.mxu0 0.0
    %272 = vmatpush1.msra.mxu0 0.0
    %273 = vmatprep.subr.mxu0 0.0
    %274 = vmatpush1.msra.mxu0 0.0
    %275 = vmatprep.subr.mxu0 0.0
    %276 = vmatpush1.msra.mxu0 0.0
    %277 = vmatprep.subr.mxu0 0.0
    %278 = vmatpush1.msra.mxu0 0.0
    %279 = vmatprep.subr.mxu0 0.0
    %280 = vmatpush1.msra.mxu0 0.0
    %281 = vmatprep.subr.mxu0 0.0
    %282 = vmatpush1.msra.mxu0 0.0
    %283 = vmatprep.subr.mxu0 0.0
    %284 = vmatpush1.msra.mxu0 0.0
    %285 = vmatprep.mubr.f32.mxu0 0.0
    %286 = vmatmul.mubr.f32.gmra.mrb[0].mxu0 %v219
    %v287 = vpop.f32.mrb[0].mxu0
    %v288 = vadd.f32 0.0, %v287
    %v289 = vpop.f32.mrb[0].mxu0
    %290 = vdwg.mxu0
    %v292 = vsel %vm217, %v216, 0
    %294 = vmatprep.subr.mxu0 0.0
    %295 = vmatpush1.msra.mxu0 %v42
    %296 = vmatprep.subr.mxu0 0.0
    %297 = vmatpush1.msra.mxu0 0.0
    %298 = vmatprep.subr.mxu0 0.0
    %299 = vmatpush1.msra.mxu0 0.0
    %300 = vmatprep.subr.mxu0 0.0
    %301 = vmatpush1.msra.mxu0 0.0
    %302 = vmatprep.subr.mxu0 0.0
    %303 = vmatpush1.msra.mxu0 0.0
    %304 = vmatprep.subr.mxu0 0.0
    %305 = vmatpush1.msra.mxu0 0.0
    %306 = vmatprep.subr.mxu0 0.0
    %307 = vmatpush1.msra.mxu0 0.0
    %308 = vmatprep.subr.mxu0 0.0
    %309 = vmatpush1.msra.mxu0 0.0
    %310 = vmatprep.subr.mxu0 0.0
    %311 = vmatpush1.msra.mxu0 0.0
    %312 = vmatprep.subr.mxu0 0.0
    %313 = vmatpush1.msra.mxu0 0.0
    %314 = vmatprep.subr.mxu0 0.0
    %315 = vmatpush1.msra.mxu0 0.0
    %316 = vmatprep.subr.mxu0 0.0
    %317 = vmatpush1.msra.mxu0 0.0
    %318 = vmatprep.subr.mxu0 0.0
    %319 = vmatpush1.msra.mxu0 0.0
    %320 = vmatprep.subr.mxu0 0.0
    %321 = vmatpush1.msra.mxu0 0.0
    %322 = vmatprep.subr.mxu0 0.0
    %323 = vmatpush1.msra.mxu0 0.0
    %324 = vmatprep.subr.mxu0 0.0
    %325 = vmatpush1.msra.mxu0 0.0
    %326 = vmatprep.subr.mxu0 0.0
    %327 = vmatpush1.msra.mxu0 0.0
    %328 = vmatprep.subr.mxu0 0.0
    %329 = vmatpush1.msra.mxu0 0.0
    %330 = vmatprep.subr.mxu0 0.0
    %331 = vmatpush1.msra.mxu0 0.0
    %332 = vmatprep.subr.mxu0 0.0
    %333 = vmatpush1.msra.mxu0 0.0
    %334 = vmatprep.subr.mxu0 0.0
    %335 = vmatpush1.msra.mxu0 0.0
    %336 = vmatprep.subr.mxu0 0.0
    %337 = vmatpush1.msra.mxu0 0.0
    %338 = vmatprep.subr.mxu0 0.0
    %339 = vmatpush1.msra.mxu0 0.0
    %340 = vmatprep.subr.mxu0 0.0
    %341 = vmatpush1.msra.mxu0 0.0
    %342 = vmatprep.subr.mxu0 0.0
    %343 = vmatpush1.msra.mxu0 0.0
    %344 = vmatprep.subr.mxu0 0.0
    %345 = vmatpush1.msra.mxu0 0.0
    %346 = vmatprep.subr.mxu0 0.0
    %347 = vmatpush1.msra.mxu0 0.0
    %348 = vmatprep.subr.mxu0 0.0
    %349 = vmatpush1.msra.mxu0 0.0
    %350 = vmatprep.subr.mxu0 0.0
    %351 = vmatpush1.msra.mxu0 0.0
    %352 = vmatprep.subr.mxu0 0.0
    %353 = vmatpush1.msra.mxu0 0.0
    %354 = vmatprep.subr.mxu0 0.0
    %355 = vmatpush1.msra.mxu0 0.0
    %356 = vmatprep.subr.mxu0 0.0
    %357 = vmatpush1.msra.mxu0 0.0
    %358 = vmatprep.mubr.f32.mxu0 0.0
    %359 = vmatmul.mubr.f32.gmra.mrb[0].mxu0 %v292
    %v360 = vpop.f32.mrb[0].mxu0
    %v361 = vadd.f32 0.0, %v360
    %v362 = vpop.f32.mrb[0].mxu0
    %363 = vdwg.mxu0
    %v366 = vrot.slane %v361, 7
    %vm367 = vcmask 1041409
    %v368 = vsel %vm367, %v366, %v288
    %vm370 = vcmask 254976
    %371 = vst.msk [vmem:[#allocation7] sm:$0x3] %vm370, %v368
    %v372 = vrot.slane %v216, 7
    %v373 = vsel %vm367, %v372, %v214
    %vm375 = vcmask 58368
    %376 = vst.msk [vmem:[#allocation8] sm:$0x3] %vm375, %v373
    // Predicated region
    $region18: #{tpu_custom_call.1} parent=1 // pred_check
      _
    $region19: #{tpu_custom_call.1} parent=1 // pred_check_branch
      %378 = sbr.rel (0) target = $region21
    $region20: #{tpu_custom_call.1} parent=1 // pred_region
      %s380 = ssub.s32 32, 32
      %381 = vsyncadd [#allocation4], %s380
      %s383 = sshll.u32 [#allocation7], 4
      %s384 = int_to_ptr.vmem [resolvable:$true] %s383
      %386 = dma.vmem_to_hbm [thread:$0]  %s384, 32, %s2, [#allocation4]
    $region21: #{tpu_custom_call.1} parent=1 // pred_fallthru
      _
    // Predicated region
    $region22: #{tpu_custom_call.1} parent=1 // pred_check
      _
    $region23: #{tpu_custom_call.1} parent=1 // pred_check_branch
      %388 = sbr.rel (0) target = $region25
    $region24: #{tpu_custom_call.1} parent=1 // pred_region
      %s390 = ssub.s32 32, 32
      %391 = vsyncadd [#allocation9], %s390
      %s393 = sshll.u32 [#allocation8], 4
      %s394 = int_to_ptr.vmem [resolvable:$true] %s393
      %396 = dma.vmem_to_hbm [thread:$0]  %s394, 32, %s3, [#allocation9]
    $region25: #{tpu_custom_call.1} parent=1 // pred_fallthru
      _
    // Predicated region
    $region26: #{tpu_custom_call.1} parent=1 // pred_check
      _
    $region27: #{tpu_custom_call.1} parent=1 // pred_check_branch
      %398 = sbr.rel (0) target = $region29
    $region28: #{tpu_custom_call.1} parent=1 // pred_region
      %399 = dma.done [#allocation4], 32
    $region29: #{tpu_custom_call.1} parent=1 // pred_fallthru
      _
    // Predicated region
    $region30: #{tpu_custom_call.1} parent=1 // pred_check
      _
    $region31: #{tpu_custom_call.1} parent=1 // pred_check_branch
      %401 = sbr.rel (0) target = $region33
    $region32: #{tpu_custom_call.1} parent=1 // pred_region
      %402 = dma.done [#allocation9], 32
    $region33: #{tpu_custom_call.1} parent=1 // pred_fallthru
      _
    %403 = vsyncpa [#allocation3], 1
    %404 = vsyncpa [#allocation6], 1
    %405 = vsyncpa [#allocation4], 1
    %406 = vsyncpa [#allocation9], 1

</llo_original>
